<compile_context>
chip_gen: v5e
topology: v5e:2x2
jax: 0.10.0
libtpu: 0.0.40
codegen_flags: <defaults>
</compile_context>

<pallas_src>
import jax
import jax.numpy as jnp
from jax.experimental import pallas as pl
from jax.experimental.pallas import tpu as pltpu

EPS = 1e-5
MOMENTUM = 0.9


def _pick_tile(dim, unit, target):
    """Largest multiple of `unit` that divides `dim` and is <= target.

    Falls back to the full dimension (always a legal block size) when the
    dimension is small or has no suitable divisor.
    """
    if dim <= target:
        return dim
    t = (target // unit) * unit
    while t >= unit:
        if dim % t == 0:
            return t
        t -= unit
    return dim


def _stats_kernel(x_ref, sum_ref, sq_ref):
    """Accumulate per-channel sum and sum-of-squares over the (N, HW) axes."""
    first = jnp.logical_and(pl.program_id(1) == 0, pl.program_id(2) == 0)

    @pl.when(first)
    def _():
        sum_ref[...] = jnp.zeros_like(sum_ref)
        sq_ref[...] = jnp.zeros_like(sq_ref)

    x = x_ref[...].astype(jnp.float32)                 # (C_tile, HW_tile)
    # Lane reductions go to the XLU; x*x is VALU.  This pass is HBM-bound, so
    # neither unit is close to saturation.
    sum_ref[...] += jnp.sum(x, axis=1, keepdims=True)  # (C_tile, 1)
    sq_ref[...] += jnp.sum(x * x, axis=1, keepdims=True)


def _norm_kernel(x_ref, a_ref, b_ref, y_ref):
    """y = a * x + b with per-channel a, b (affine + normalization folded)."""
    x = x_ref[...].astype(jnp.float32)                 # (C_tile, HW_tile)
    y_ref[...] = (x * a_ref[...] + b_ref[...]).astype(y_ref.dtype)


def batch_norm_pallas(x_nchw, gamma, beta, moving_mean, moving_var,
                      eps=EPS, momentum=MOMENTUM):
    """Training-mode BatchNorm forward.

    x_nchw:       (N, C, H, W)
    gamma/beta:   (1, C, 1, 1)
    moving_mean:  (1, C, 1, 1)
    moving_var:   (1, C, 1, 1)
    returns (y, new_moving_mean, new_moving_var) with the same shapes.
    """
    N, C, H, W = x_nchw.shape
    HW = H * W

    # Free reshape of the contiguous NCHW buffer -- no HBM transpose.
    x3 = x_nchw.reshape(N, C, HW)

    # Sublane (channel) / lane (spatial) tiles.  ~<= 2 MiB per f32 block:
    # pass 2 double-buffers x and y -> <= ~8 MiB, within default scoped VMEM.
    ct = _pick_tile(C, 8, 256)       # sublane axis: multiple of 8 when possible
    hwt = _pick_tile(HW, 128, 2048)  # lane axis: multiple of 128 when possible
    grid = (C // ct, N, HW // hwt)   # (channel tiles, batch, spatial tiles)

    x_spec = pl.BlockSpec((None, ct, hwt), lambda c, n, m: (n, c, m))
    col_spec = pl.BlockSpec((ct, 1), lambda c, n, m: (c, 0))

    # ---- Pass 1: per-channel sum / sum-of-squares (reduction axes last). ----
    sums, sqs = pl.pallas_call(
        _stats_kernel,
        grid=grid,
        in_specs=[x_spec],
        out_specs=(col_spec, col_spec),
        out_shape=(
            jax.ShapeDtypeStruct((C, 1), jnp.float32),
            jax.ShapeDtypeStruct((C, 1), jnp.float32),
        ),
        compiler_params=pltpu.CompilerParams(
            dimension_semantics=("parallel", "arbitrary", "arbitrary")),
    )(x3)

    # ---- O(C) finalization in plain JAX (negligible work). ----
    count = jnp.float32(N * HW)
    mean = sums / count                                        # (C, 1)
    var = jnp.maximum(sqs / count - mean * mean, 0.0)          # biased, >= 0
    inv_std = jax.lax.rsqrt(var + eps)
    a = gamma.reshape(C, 1).astype(jnp.float32) * inv_std      # (C, 1)
    b = beta.reshape(C, 1).astype(jnp.float32) - mean * a      # (C, 1)

    # ---- Pass 2: y = a * x + b, streamed in the native layout. ----
    y3 = pl.pallas_call(
        _norm_kernel,
        grid=grid,
        in_specs=[x_spec, col_spec, col_spec],
        out_specs=pl.BlockSpec((None, ct, hwt), lambda c, n, m: (n, c, m)),
        out_shape=jax.ShapeDtypeStruct((N, C, HW), x_nchw.dtype),
        compiler_params=pltpu.CompilerParams(
            dimension_semantics=("parallel", "parallel", "parallel")),
    )(x3, a, b)

    y = y3.reshape(N, C, H, W)

    # Moving-stat update (O(C), matches the spec: biased batch variance).
    mm = moving_mean.reshape(C, 1).astype(jnp.float32)
    mv = moving_var.reshape(C, 1).astype(jnp.float32)
    new_mm = momentum * mm + (1.0 - momentum) * mean
    new_mv = momentum * mv + (1.0 - momentum) * var

    return (y,
            new_mm.reshape(1, C, 1, 1).astype(moving_mean.dtype),
            new_mv.reshape(1, C, 1, 1).astype(moving_var.dtype))


def _reference(x, gamma, beta, moving_mean, moving_var,
               eps=EPS, momentum=MOMENTUM):
    # Pure-JAX mirror of the PyTorch training branch.
    mean = jnp.mean(x, axis=(0, 2, 3), keepdims=True)
    var = jnp.mean((x - mean) ** 2, axis=(0, 2, 3), keepdims=True)
    x_hat = (x - mean) / jnp.sqrt(var + eps)
    y = gamma * x_hat + beta
    nmm = momentum * moving_mean + (1.0 - momentum) * mean
    nmv = momentum * moving_var + (1.0 - momentum) * var
    return y, nmm, nmv


if __name__ == "__main__":
    key = jax.random.PRNGKey(0)
    kx, kg, kb = jax.random.split(key, 3)
    N, C, H, W = 2, 4, 16, 16

    x = jax.random.normal(kx, (N, C, H, W), dtype=jnp.float32)
    # Non-trivial affine parameters (deterministic) to exercise gamma/beta.
    gamma = 1.0 + 0.1 * jax.random.normal(kg, (1, C, 1, 1), dtype=jnp.float32)
    beta = 0.1 * jax.random.normal(kb, (1, C, 1, 1), dtype=jnp.float32)
    moving_mean = jnp.zeros((1, C, 1, 1), dtype=jnp.float32)
    moving_var = jnp.ones((1, C, 1, 1), dtype=jnp.float32)

    y, nmm, nmv = batch_norm_pallas(x, gamma, beta, moving_mean, moving_var)
    jax.block_until_ready((y, nmm, nmv))

    y_ref, nmm_ref, nmv_ref = _reference(x, gamma, beta, moving_mean, moving_var)
    assert y.shape == y_ref.shape and nmm.shape == nmm_ref.shape
    assert jnp.allclose(y, y_ref, atol=1e-5, rtol=1e-5)
    assert jnp.allclose(nmm, nmm_ref, atol=1e-5, rtol=1e-5)
    assert jnp.allclose(nmv, nmv_ref, atol=1e-5, rtol=1e-5)

    print("KERNEL_OK")
</pallas_src>

<mosaic_0001>
module attributes {stable_mosaic.version = 11 : i64} {
  func.func @_stats_kernel(%arg0: i32, %arg1: i32, %arg2: i32, %arg3: memref<1x4x256xf32, #tpu.memory_space<vmem>>, %arg4: memref<4x1xf32, #tpu.memory_space<vmem>>, %arg5: memref<4x1xf32, #tpu.memory_space<vmem>>) attributes {dimension_semantics = [#tpu.dimension_semantics<parallel>, #tpu.dimension_semantics<arbitrary>, #tpu.dimension_semantics<arbitrary>], iteration_bounds = array<i64: 1, 2, 1>, scalar_prefetch = 0 : i64, scratch_operands = 0 : i64, tpu.core_type = #tpu.core_type<tc>, window_params = [{transform_indices = @transform_0, window_bounds = array<i64: 1, 4, 256>}, {transform_indices = @transform_1, window_bounds = array<i64: 4, 1>}, {transform_indices = @transform_2, window_bounds = array<i64: 4, 1>}]} {
    %c0_i32 = arith.constant 0 : i32
    %0 = arith.cmpi eq, %arg1, %c0_i32 : i32
    %c0_i32_0 = arith.constant 0 : i32
    %1 = arith.cmpi eq, %arg2, %c0_i32_0 : i32
    %2 = arith.andi %0, %1 : i1
    %3 = arith.extui %2 : i1 to i32
    %c0_i32_1 = arith.constant 0 : i32
    %4 = arith.cmpi ne, %3, %c0_i32_1 : i32
    scf.if %4 {
      %cst_13 = arith.constant 0.000000e+00 : f32
      %18 = vector.broadcast %cst_13 : f32 to vector<4x1xf32>
      %c0_14 = arith.constant 0 : index
      %c0_15 = arith.constant 0 : index
      %19 = vector.load %arg4[%c0_14, %c0_15] : memref<4x1xf32, #tpu.memory_space<vmem>>, vector<4x1xf32>
      tpu.vector_store %arg4[%c0_14, %c0_15], %18 {strides = array<i32>} : memref<4x1xf32, #tpu.memory_space<vmem>>, vector<4x1xf32>,
      %cst_16 = arith.constant 0.000000e+00 : f32
      %20 = vector.broadcast %cst_16 : f32 to vector<4x1xf32>
      %c0_17 = arith.constant 0 : index
      %c0_18 = arith.constant 0 : index
      %21 = vector.load %arg5[%c0_17, %c0_18] : memref<4x1xf32, #tpu.memory_space<vmem>>, vector<4x1xf32>
      tpu.vector_store %arg5[%c0_17, %c0_18], %20 {strides = array<i32>} : memref<4x1xf32, #tpu.memory_space<vmem>>, vector<4x1xf32>,
    } else {
    }
    %c0 = arith.constant 0 : index
    %c0_2 = arith.constant 0 : index
    %c0_3 = arith.constant 0 : index
    %5 = vector.load %arg3[%c0, %c0_2, %c0_3] : memref<1x4x256xf32, #tpu.memory_space<vmem>>, vector<1x4x256xf32>
    %6 = vector.shape_cast %5 : vector<1x4x256xf32> to vector<4x256xf32>
    %c0_4 = arith.constant 0 : index
    %c0_5 = arith.constant 0 : index
    %7 = vector.load %arg4[%c0_4, %c0_5] : memref<4x1xf32, #tpu.memory_space<vmem>>, vector<4x1xf32>
    %cst = arith.constant dense<0.000000e+00> : vector<4xf32>
    %8 = vector.multi_reduction <add>, %6, %cst [1] : vector<4x256xf32> to vector<4xf32>
    %9 = vector.shape_cast %8 : vector<4xf32> to vector<4x1xf32>
    %10 = arith.addf %7, %9 : vector<4x1xf32>
    %c0_6 = arith.constant 0 : index
    %c0_7 = arith.constant 0 : index
    %11 = vector.load %arg4[%c0_6, %c0_7] : memref<4x1xf32, #tpu.memory_space<vmem>>, vector<4x1xf32>
    tpu.vector_store %arg4[%c0_6, %c0_7], %10 {strides = array<i32>} : memref<4x1xf32, #tpu.memory_space<vmem>>, vector<4x1xf32>,
    %c0_8 = arith.constant 0 : index
    %c0_9 = arith.constant 0 : index
    %12 = vector.load %arg5[%c0_8, %c0_9] : memref<4x1xf32, #tpu.memory_space<vmem>>, vector<4x1xf32>
    %13 = arith.mulf %6, %6 : vector<4x256xf32>
    %cst_10 = arith.constant dense<0.000000e+00> : vector<4xf32>
    %14 = vector.multi_reduction <add>, %13, %cst_10 [1] : vector<4x256xf32> to vector<4xf32>
    %15 = vector.shape_cast %14 : vector<4xf32> to vector<4x1xf32>
    %16 = arith.addf %12, %15 : vector<4x1xf32>
    %c0_11 = arith.constant 0 : index
    %c0_12 = arith.constant 0 : index
    %17 = vector.load %arg5[%c0_11, %c0_12] : memref<4x1xf32, #tpu.memory_space<vmem>>, vector<4x1xf32>
    tpu.vector_store %arg5[%c0_11, %c0_12], %16 {strides = array<i32>} : memref<4x1xf32, #tpu.memory_space<vmem>>, vector<4x1xf32>,
    return
  }
  func.func @transform_0(%arg0: i32, %arg1: i32, %arg2: i32) -> (i32, i32, i32) {
    %c0_i32 = arith.constant 0 : i32
    return %arg1, %arg0, %arg2 : i32, i32, i32
  }
  func.func @transform_1(%arg0: i32, %arg1: i32, %arg2: i32) -> (i32, i32) {
    %c0_i32 = arith.constant 0 : i32
    %c0_i32_0 = arith.constant 0 : i32
    return %arg0, %c0_i32 : i32, i32
  }
  func.func @transform_2(%arg0: i32, %arg1: i32, %arg2: i32) -> (i32, i32) {
    %c0_i32 = arith.constant 0 : i32
    %c0_i32_0 = arith.constant 0 : i32
    return %arg0, %c0_i32 : i32, i32
  }
}

</mosaic_0001>

<llo_original>
// kernel: tpu_custom_call.1
$region0: #{tpu_custom_call.1}
  #allocation0 [shape = 'u32[]', space=smem, size = 0x4, offset = 0x4, fixed_abs, tag = 'smem constant byte address 0x4 - core index']
  #allocation1 [shape = 'u32[72,128]{1,0:T(1,128)}', space=vmem, size = 0x9000, scoped, tag = 'internal scratch']
  %s0 = inlined_call_operand.hbm [shape: f32[2,4,256], index: 0, kind: input, shape index: {}]
  %s1 = inlined_call_operand.vmem [shape: f32[4,1], index: 1, kind: output, shape index: {0}]
  %s2 = inlined_call_operand.vmem [shape: f32[4,1], index: 2, kind: output, shape index: {1}]
  %3 = xla_tuple %s1, %s2
  %s4 = sld [smem:[#allocation0]]
  $region53: #{tpu_custom_call.1} parent=0
    _
  %s6 = ssub.s32 1, %s4
  %s7 = scalar_select 0, %s6, %s4
  $region1: #{tpu_custom_call.1} parent=0
    #allocation2 [shape = 'u8[8192]{0}', space=vmem, size = 0x2000, scoped, tag = 'input window, operand 0']
    #allocation3 [shape = 's32[2]{0}', space=sflag, size = 0x8, scoped, tag = 'scoped memory for tpu_custom_call.1']
    %8 = vsyncpa [#allocation3], 0
    %s9 = scalar_lea.sflag [#allocation3], 1
    %10 = vsyncpa %s9, 0
    loop: start=0, step=1, limit=4
    $region2: #{tpu_custom_call.1} parent=1 // loop_pre_header
      _
    $region3: #{tpu_custom_call.1} parent=1 // loop_header
      %s12 = sphi 0, %s16
      %p13 = scmp.ge.s32.totalorder %s12, 4
      %s19 = sphi 0, %s38
      %s20 = sphi 0, %s34
      %s21 = sphi 0, %s30
      %s22 = sphi 0, %s19
      %s23 = sphi 0, %s20
      %s24 = sphi 0, %s21
      %s25 = sphi 0, %s22
      %s26 = sphi 0, %s23
      %s27 = sphi 0, %s24
      %s45 = sphi 0, %s47
      %s48 = sphi 0, %s45
      %s49 = sphi 0, %s48
      %s65 = sphi 0, %s49
      %s71 = sphi 0, %s73
      %s74 = sphi 0, %s71
      %s75 = sphi 0, %s74
      %s91 = sphi 0, %s75
      %s97 = sphi 0, %s99
      %s100 = sphi 0, %s97
      %s101 = sphi 0, %s100
      %s117 = sphi 0, %s101
    $region4: #{tpu_custom_call.1} parent=1 // loop_header_branch
      %15 = sbr.rel (%p13) target = $region8
    $region5: #{tpu_custom_call.1} parent=1 // loop_body
      %s17 = ssub.s32 %s12, 1
      %s18 = ssub.s32 %s12, 2
      %s28 = sadd.s32 1, %s21
      %p29 = scmp.ge.s32.totalorder %s28, 1
      %s30 = scalar_select %p29, 0, %s28
      %s31 = sadd.s32 1, %s20
      %s32 = scalar_select %p29, %s31, %s20
      %p33 = scmp.ge.s32.totalorder %s32, 2
      %s34 = scalar_select %p33, 0, %s32
      %s35 = sadd.s32 1, %s19
      %s36 = scalar_select %p33, %s35, %s19
      %p37 = scmp.ge.s32.totalorder %s36, 1
      %s38 = scalar_select %p37, 0, %s36
      %s39 = ssub.s32 %s20, %s34
      %s40 = ssub.s32 %s19, %s38
      %s41 = sor.u32 %s39, %s40
      %s42 = ssub.s32 %s21, %s30
      %s43 = sor.u32 %s41, %s42
      %p44 = scmp.eq.s32.totalorder %s43, 0
      %s46 = sadd.s32 %s45, 1
      %s47 = scalar_select %p44, %s45, %s46
      %p50 = pneg %p44
      %p51 = scmp.eq.s32.totalorder %s12, 1
      %p52 = por %p50, %p51
      %p53 = scmp.ne.s32.totalorder %s45, %s48
      %p54 = scmp.eq.s32.totalorder %s12, 0
      %p55 = por %p53, %p54
      %p56 = scmp.ne.s32.totalorder %s45, %s48
      %p57 = scmp.eq.s32.totalorder %s17, 1
      %p58 = por %p56, %p57
      %p59 = scmp.ne.s32.totalorder %s48, %s49
      %p60 = scmp.eq.s32.totalorder %s17, 0
      %p61 = por %p59, %p60
      %p62 = scmp.ne.s32.totalorder %s48, %s49
      %p63 = scmp.eq.s32.totalorder %s18, 1
      %p64 = por %p62, %p63
      %p66 = scmp.ne.s32.totalorder %s49, %s65
      %p67 = scmp.eq.s32.totalorder %s18, 0
      %p68 = por %p66, %p67
      %s69 = ssub.s32 %s19, %s38
      %p70 = scmp.eq.s32.totalorder %s69, 0
      %s72 = sadd.s32 %s71, 1
      %s73 = scalar_select %p70, %s71, %s72
      %p76 = pneg %p70
      %p77 = scmp.eq.s32.totalorder %s12, 1
      %p78 = por %p76, %p77
      %p79 = scmp.ne.s32.totalorder %s71, %s74
      %p80 = scmp.eq.s32.totalorder %s12, 0
      %p81 = por %p79, %p80
      %p82 = scmp.ne.s32.totalorder %s71, %s74
      %p83 = scmp.eq.s32.totalorder %s17, 1
      %p84 = por %p82, %p83
      %p85 = scmp.ne.s32.totalorder %s74, %s75
      %p86 = scmp.eq.s32.totalorder %s17, 0
      %p87 = por %p85, %p86
      %p88 = scmp.ne.s32.totalorder %s74, %s75
      %p89 = scmp.eq.s32.totalorder %s18, 1
      %p90 = por %p88, %p89
      %p92 = scmp.ne.s32.totalorder %s75, %s91
      %p93 = scmp.eq.s32.totalorder %s18, 0
      %p94 = por %p92, %p93
      %s95 = ssub.s32 %s19, %s38
      %p96 = scmp.eq.s32.totalorder %s95, 0
      %s98 = sadd.s32 %s97, 1
      %s99 = scalar_select %p96, %s97, %s98
      %p102 = pneg %p96
      %p103 = scmp.eq.s32.totalorder %s12, 1
      %p104 = por %p102, %p103
      %p105 = scmp.ne.s32.totalorder %s97, %s100
      %p106 = scmp.eq.s32.totalorder %s12, 0
      %p107 = por %p105, %p106
      %p108 = scmp.ne.s32.totalorder %s97, %s100
      %p109 = scmp.eq.s32.totalorder %s17, 1
      %p110 = por %p108, %p109
      %p111 = scmp.ne.s32.totalorder %s100, %s101
      %p112 = scmp.eq.s32.totalorder %s17, 0
      %p113 = por %p111, %p112
      %p114 = scmp.ne.s32.totalorder %s100, %s101
      %p115 = scmp.eq.s32.totalorder %s18, 1
      %p116 = por %p114, %p115
      %p118 = scmp.ne.s32.totalorder %s101, %s117
      %p119 = scmp.eq.s32.totalorder %s18, 0
      %p120 = por %p118, %p119
      %p121 = scmp.le.s32.totalorder 1, %s12
      %p122 = scmp.lt.s32.totalorder %s12, 3
      %p123 = pnand %p121, %p122
      %p124 = pneg %p123
      // Predicated region
      $region9: #{tpu_custom_call.1} parent=5 // pred_check
        _
      $region10: #{tpu_custom_call.1} parent=5 // pred_check_branch
        %126 = sbr.rel (%p123) target = $region12
      $region11: #{tpu_custom_call.1} parent=5 // pred_region
        %s127 = ssub.s32 %s12, 1
      $region12: #{tpu_custom_call.1} parent=5 // pred_fallthru
        _
      %p128 = scmp.lt.s32.totalorder %s12, 2
      // Predicated region
      $region13: #{tpu_custom_call.1} parent=5 // pred_check
        %p129 = pneg %p128
      $region14: #{tpu_custom_call.1} parent=5 // pred_check_branch
        %131 = sbr.rel (%p129) target = $region16
      $region15: #{tpu_custom_call.1} parent=5 // pred_region
        // Predicated region
        $region17: #{tpu_custom_call.1} parent=15 // pred_check
          %p132 = pneg %p55
        $region18: #{tpu_custom_call.1} parent=15 // pred_check_branch
          %134 = sbr.rel (%p132) target = $region20
        $region19: #{tpu_custom_call.1} parent=15 // pred_region
          %s135 = sand.u32 %s45, 1
          %s136 = scalar_lea.sflag [#allocation3], %s135
          %s137 = sand.u32 %s45, 1
          %s138 = smul.addr %s137, 8
          %s139 = scalar_lea.vmem [#allocation2], %s138
          %s140 = smul.u32 2, %s21
          %142 = vsyncadd %s136, 0
          %s143 = smul.addr %s19, 2
          %s144 = sadd.s32 %s140, %s143
          %s145 = smul.addr %s20, 2
          %s146 = sadd.s32 %s144, %s145
          %s147 = smul.addr %s146, 4
          %s148 = scalar_lea.hbm %s0, %s147
          %s150 = sshll.u32 %s148, 4
          %s151 = int_to_ptr.hbm [resolvable:$true] %s150
          %s152 = sshll.u32 %s139, 4
          %s153 = int_to_ptr.vmem [resolvable:$true] %s152
          %155 = dma.hbm_to_vmem [thread:$0]  %s151, 128, %s153, %s136
        $region20: #{tpu_custom_call.1} parent=15 // pred_fallthru
          _
      $region16: #{tpu_custom_call.1} parent=5 // pred_fallthru
        _
      %p156 = scmp.le.s32.totalorder 1, %s12
      %p157 = scmp.lt.s32.totalorder %s12, 3
      %p158 = pnand %p156, %p157
      %p159 = pneg %p158
      // Predicated region
      $region21: #{tpu_custom_call.1} parent=5 // pred_check
        _
      $region22: #{tpu_custom_call.1} parent=5 // pred_check_branch
        %161 = sbr.rel (%p158) target = $region24
      $region23: #{tpu_custom_call.1} parent=5 // pred_region
        %s162 = ssub.s32 %s12, 1
        %s163 = sand.u32 %s48, 1
        %s164 = scalar_lea.sflag [#allocation3], %s163
        %s165 = sand.u32 %s48, 1
        %s166 = smul.addr %s165, 8
        %s167 = scalar_lea.vmem [#allocation2], %s166
        // Predicated region
        $region25: #{tpu_custom_call.1} parent=23 // pred_check
          %p168 = pneg %p61
        $region26: #{tpu_custom_call.1} parent=23 // pred_check_branch
          %170 = sbr.rel (%p168) target = $region28
        $region27: #{tpu_custom_call.1} parent=23 // pred_region
          %172 = dma.done %s164, 128
        $region28: #{tpu_custom_call.1} parent=23 // pred_fallthru
          _
        %s173 = sand.u32 %s48, 1
        %s174 = scalar_lea.sflag [#allocation3], %s173
        %s175 = sand.u32 %s48, 1
        %s176 = smul.addr %s175, 8
        %s177 = scalar_lea.vmem [#allocation2], %s176
        %p178 = pneg %p61
        %p179 = pneg %p58
        %p180 = pneg %p87
        %p181 = pneg %p84
        %p182 = scmp.lt.s32.totalorder %s22, 0
        %s183 = scalar_select %p182, %s22, 0
        %s184 = smul.addr %s183, 4
        %s185 = scalar_lea.vmem %s1, %s184
        %p186 = pneg %p113
        %p187 = pneg %p110
        %p188 = scmp.lt.s32.totalorder %s22, 0
        %s189 = scalar_select %p188, %s22, 0
        %s190 = smul.addr %s189, 4
        %s191 = scalar_lea.vmem %s2, %s190
        %s192 = smul.u32 2, %s24
        %p193 = scmp.lt.s32.totalorder %s22, 0
        %s194 = scalar_select %p193, %s22, 0
        %s195 = smul.addr %s194, 4
        %s196 = scalar_lea.vmem %s1, %s195
        %p197 = scmp.lt.s32.totalorder %s22, 0
        %s198 = scalar_select %p197, %s22, 0
        %s199 = smul.addr %s198, 4
        %s200 = scalar_lea.vmem %s2, %s199
        %p201 = scmp.eq.s32.totalorder %s23, 0
        %p202 = scmp.eq.s32.totalorder %s24, 0
        %p203 = pnand %p201, %p202
        %p204 = pneg %p203
        // Predicated region
        $region29: #{tpu_custom_call.1} parent=23 // pred_check
          _
        $region30: #{tpu_custom_call.1} parent=23 // pred_check_branch
          %206 = sbr.rel (%p203) target = $region32
        $region31: #{tpu_custom_call.1} parent=23 // pred_region
          %vm207 = vcmask 3072
          %208 = vst.msk [vmem:[%s196] sm:$0xf] %vm207, 0.0
          %209 = vst.msk [vmem:[%s200] sm:$0xf] %vm207, 0.0
        $region32: #{tpu_custom_call.1} parent=23 // pred_fallthru
          _
        %v210 = vld [vmem:[%s167] sm:$0xff]
        %v211 = vld [vmem:[%s196] sm:$0xf]
        %213 = vst [vmem:[#allocation1] ss:$2 sm:$0xff] %v210
        %v214 = vld.sshfl [vmem:[#allocation1] sm:$0xff pattern:$0x75316420]
        %v215 = vld.sshfl [vmem:[#allocation1 + $0x8] sm:$0xff pattern:$0x75316420]
        %vm218 = vcmask 1043456
        %v219 = vsel %vm218, %v214, 0.0
        %v220 = vsel %vm218, %v215, 0.0
        %v221 = vadd.f32 %v219, %v220
        %222 = vadd.xlane.f32.xlu0 %v221
        %v223 = vpop.xlane.xlu0 %222
        %v224 = vadd.f32 %v211, %v223
        %vm225 = vcmask 3072
        %226 = vst.msk [vmem:[%s196] sm:$0xf] %vm225, %v224
        %v227 = vld [vmem:[%s200] sm:$0xf]
        %v228 = vmul.f32 %v210, %v210
        %230 = vst [vmem:[#allocation1] ss:$2 sm:$0xff] %v228
        %v231 = vld.sshfl [vmem:[#allocation1] sm:$0xff pattern:$0x75316420]
        %v232 = vld.sshfl [vmem:[#allocation1 + $0x8] sm:$0xff pattern:$0x75316420]
        %v235 = vsel %vm218, %v231, 0.0
        %v236 = vsel %vm218, %v232, 0.0
        %v237 = vadd.f32 %v235, %v236
        %238 = vadd.xlane.f32.xlu0 %v237
        %v239 = vpop.xlane.xlu0 %238
        %v240 = vadd.f32 %v227, %v239
        %241 = vst.msk [vmem:[%s200] sm:$0xf] %vm225, %v240
        %p242 = scmp.lt.s32.totalorder %s22, 0
        %s243 = scalar_select %p242, %s22, 0
        %s244 = smul.addr %s243, 4
        %s245 = scalar_lea.vmem %s1, %s244
        %p246 = scmp.lt.s32.totalorder %s22, 0
        %s247 = scalar_select %p246, %s22, 0
        %s248 = smul.addr %s247, 4
        %s249 = scalar_lea.vmem %s2, %s248
        // Predicated region
        $region33: #{tpu_custom_call.1} parent=23 // pred_check
          %p250 = pneg %p84
        $region34: #{tpu_custom_call.1} parent=23 // pred_check_branch
          %252 = sbr.rel (%p250) target = $region36
        $region35: #{tpu_custom_call.1} parent=23 // pred_region
          _
        $region36: #{tpu_custom_call.1} parent=23 // pred_fallthru
          _
        // Predicated region
        $region37: #{tpu_custom_call.1} parent=23 // pred_check
          %p253 = pneg %p110
        $region38: #{tpu_custom_call.1} parent=23 // pred_check_branch
          %255 = sbr.rel (%p253) target = $region40
        $region39: #{tpu_custom_call.1} parent=23 // pred_region
          _
        $region40: #{tpu_custom_call.1} parent=23 // pred_fallthru
          _
        // Predicated region
        $region41: #{tpu_custom_call.1} parent=23 // pred_check
          %p256 = pneg %p84
        $region42: #{tpu_custom_call.1} parent=23 // pred_check_branch
          %258 = sbr.rel (%p256) target = $region44
        $region43: #{tpu_custom_call.1} parent=23 // pred_region
          %p259 = scmp.lt.s32.totalorder %s22, 0
          %s260 = scalar_select %p259, %s22, 0
          %s261 = smul.addr %s260, 4
          %s262 = scalar_lea.vmem %s1, %s261
        $region44: #{tpu_custom_call.1} parent=23 // pred_fallthru
          _
        // Predicated region
        $region45: #{tpu_custom_call.1} parent=23 // pred_check
          %p263 = pneg %p110
        $region46: #{tpu_custom_call.1} parent=23 // pred_check_branch
          %265 = sbr.rel (%p263) target = $region48
        $region47: #{tpu_custom_call.1} parent=23 // pred_region
          %p266 = scmp.lt.s32.totalorder %s22, 0
          %s267 = scalar_select %p266, %s22, 0
          %s268 = smul.addr %s267, 4
          %s269 = scalar_lea.vmem %s2, %s268
        $region48: #{tpu_custom_call.1} parent=23 // pred_fallthru
          _
      $region24: #{tpu_custom_call.1} parent=5 // pred_fallthru
        _
      %p270 = scmp.le.s32.totalorder 2, %s12
      // Predicated region
      $region49: #{tpu_custom_call.1} parent=5 // pred_check
        %p271 = pneg %p270
      $region50: #{tpu_custom_call.1} parent=5 // pred_check_branch
        %273 = sbr.rel (%p271) target = $region52
      $region51: #{tpu_custom_call.1} parent=5 // pred_region
        %s274 = ssub.s32 %s12, 2
      $region52: #{tpu_custom_call.1} parent=5 // pred_fallthru
        _
    $region6: #{tpu_custom_call.1} parent=1 // loop_footer
      %s16 = sadd.s32 1, %s12
    $region7: #{tpu_custom_call.1} parent=1 // loop_footer_branch
      %11 = sbr.rel target = $region3
    $region8: #{tpu_custom_call.1} parent=1 // loop_exit
      _
    %275 = vsyncpa [#allocation3], 1
    %s276 = scalar_lea.sflag [#allocation3], 1
    %277 = vsyncpa %s276, 1

</llo_original>
